<compile_context>
chip_gen: v7x
topology: tpu7x:2x2x1
jax: 0.10.0
libtpu: 0.0.40
codegen_flags: <defaults>
</compile_context>

<pallas_src>
import jax
import jax.numpy as jnp
from jax import lax
from jax.experimental import pallas as pl
from jax.experimental.pallas import tpu as pltpu

EPS = 1e-5
COUT = 8
CIN = 3


# --------------------------------------------------------------- tile picker
def _pick_tile(hw, cap=16384):
    """Lane-tile size: full H*W if small, else the largest 128-multiple divisor <= cap."""
    if hw <= cap:
        return hw
    start = cap - (cap % 128)
    for t in range(start, 127, -128):
        if hw % t == 0:
            return t
    # Fallback: largest divisor <= cap (may not be 128-aligned -> masked stores).
    for t in range(cap, 0, -1):
        if hw % t == 0:
            return t
    return hw


# ------------------------------------------------------------- kernel helpers
def _conv1x1(w, x):
    """(COUT, CIN) x (CIN, TM) -> (COUT, TM) via unrolled VPU broadcast-FMAs (exact f32)."""
    acc = w[:, 0:1] * x[0:1, :]
    for c in range(1, CIN):
        acc = acc + w[:, c:c + 1] * x[c:c + 1, :]
    return acc


# ------------------------------------------------------------- pass-1 kernel
def _stats_kernel(x1_ref, x2_ref, w1_ref, w2_ref,
                  s1_ref, s11_ref, s2_ref, s22_ref, s12_ref):
    """Accumulate per-channel moments of u1 = W1*x1, u2 = W2*x2 (bias-free)."""
    first = (pl.program_id(0) == 0) & (pl.program_id(1) == 0)

    @pl.when(first)
    def _init():
        s1_ref[...] = jnp.zeros_like(s1_ref)
        s11_ref[...] = jnp.zeros_like(s11_ref)
        s2_ref[...] = jnp.zeros_like(s2_ref)
        s22_ref[...] = jnp.zeros_like(s22_ref)
        s12_ref[...] = jnp.zeros_like(s12_ref)

    u1 = _conv1x1(w1_ref[...], x1_ref[...])          # (8, TM)
    u2 = _conv1x1(w2_ref[...], x2_ref[...])          # (8, TM)

    s1_ref[...] += jnp.sum(u1, axis=1, keepdims=True)
    s11_ref[...] += jnp.sum(u1 * u1, axis=1, keepdims=True)
    s2_ref[...] += jnp.sum(u2, axis=1, keepdims=True)
    s22_ref[...] += jnp.sum(u2 * u2, axis=1, keepdims=True)
    s12_ref[...] += jnp.sum(u1 * u2, axis=1, keepdims=True)


# ------------------------------------------------------------- pass-2 kernel
def _apply_kernel(x1_ref, x2_ref, w1_ref, w2_ref, c_ref, o_ref):
    """v8 = (alpha.W1) x1 + (beta.W2) x2 + const  (per-channel affine, pre-folded)."""
    y = _conv1x1(w1_ref[...], x1_ref[...]) + _conv1x1(w2_ref[...], x2_ref[...])
    o_ref[...] = y + c_ref[...]


# ------------------------------------------------------------------- wrapper
def model_forward(x1_nchw, x2_nchw, params):
    w1, b1, w2, b2 = params                 # (8,3), (8,), (8,3), (8,)
    N, _, H, W = x1_nchw.shape
    Hp, Wp = H + 2, W + 2
    HW = H * W
    TM = _pick_tile(HW)
    n_m = HW // TM
    n_tot = float(N * Hp * Wp)              # total output pixels (interior + pad ring)

    # Free (metadata-only) views; no HBM copies before the kernels.
    x1f = x1_nchw.reshape(N, CIN, HW)
    x2f = x2_nchw.reshape(N, CIN, HW)

    x_spec = pl.BlockSpec((None, CIN, TM), lambda n, m: (n, 0, m))
    w_spec = pl.BlockSpec((COUT, CIN), lambda n, m: (0, 0))
    c_spec = pl.BlockSpec((COUT, 1), lambda n, m: (0, 0))

    # ---- pass 1: per-channel first/second moments of W1*x1 and W2*x2 --------
    stat_shape = jax.ShapeDtypeStruct((COUT, 1), jnp.float32)
    stats = pl.pallas_call(
        _stats_kernel,
        out_shape=(stat_shape,) * 5,
        grid=(N, n_m),
        in_specs=[x_spec, x_spec, w_spec, w_spec],
        out_specs=[c_spec] * 5,
        compiler_params=pltpu.CompilerParams(
            dimension_semantics=("arbitrary", "arbitrary")),
    )(x1f, x2f, w1, w2)
    S1, S11, S2, S22, S12 = (s[:, 0] for s in stats)

    # ---- closed-form BN folding (tiny (8,)-vector math) ----------------------
    # Ring pixels have x = 0, so they contribute 0 to the bias-free sums above;
    # dividing by n_tot already accounts for them.
    m1r = S1 / n_tot
    m2r = S2 / n_tot
    var1 = S11 / n_tot - m1r * m1r          # biased variance of v1 (bias shift cancels)
    var2 = S22 / n_tot - m2r * m2r
    cov12 = S12 / n_tot - m1r * m2r
    mean1 = m1r + b1
    mean2 = m2r + b2

    s1 = lax.rsqrt(var1 + EPS)
    a = 1.0 + s1
    var3 = a * a * var1 + 2.0 * a * cov12 + var2
    s3 = lax.rsqrt(var3 + EPS)

    alpha = s3 * a + s1                     # v8 = alpha*v1 + beta*v2 + cchan
    beta = s3 + 1.0
    cchan = -(alpha * mean1 + s3 * mean2)
    const = alpha * b1 + beta * b2 + cchan  # per-channel constant == ring value

    w1s = alpha[:, None] * w1               # fold affine into the conv weights
    w2s = beta[:, None] * w2
    cvec = const.reshape(COUT, 1).astype(jnp.float32)

    # ---- pass 2: streaming rescaled 1x1 conv + per-channel constant ----------
    out_flat = pl.pallas_call(
        _apply_kernel,
        out_shape=jax.ShapeDtypeStruct((N, COUT, HW), jnp.float32),
        grid=(N, n_m),
        in_specs=[x_spec, x_spec, w_spec, w_spec, c_spec],
        out_specs=pl.BlockSpec((None, COUT, TM), lambda n, m: (n, 0, m)),
        compiler_params=pltpu.CompilerParams(
            dimension_semantics=("parallel", "parallel")),
    )(x1f, x2f, w1s, w2s, cvec)

    # ---- assemble padded NCHW output: ring pixels are the per-channel const --
    interior = out_flat.reshape(N, COUT, H, W)
    canvas = jnp.broadcast_to(const[None, :, None, None].astype(jnp.float32),
                              (N, COUT, Hp, Wp))
    return lax.dynamic_update_slice(canvas, interior, (0, 0, 1, 1))


# --------------------------------------------------------------- JAX oracle
def _reference(x1, x2, params):
    w1, b1, w2, b2 = params
    hp = lax.Precision.HIGHEST

    def conv(x, w, b):
        xp = jnp.pad(x, ((0, 0), (0, 0), (1, 1), (1, 1)))
        return jnp.einsum("nchw,oc->nohw", xp, w, precision=hp) + b[None, :, None, None]

    def bn(v):
        m = jnp.mean(v, axis=(0, 2, 3), keepdims=True)
        var = jnp.mean((v - m) ** 2, axis=(0, 2, 3), keepdims=True)
        return (v - m) / jnp.sqrt(var + EPS)

    v1 = conv(x1, w1, b1)
    v2 = conv(x2, w2, b2)
    v5 = bn(v1)
    v6 = v5 + v2
    v3 = v1 + v6
    v7 = bn(v3)
    return v7 + v6


if __name__ == "__main__":
    key = jax.random.PRNGKey(0)
    k1, k2, kw1, kb1, kw2, kb2 = jax.random.split(key, 6)

    # Small shapes consistent with the module: NCHW, 3 in-channels.
    N, H, W = 2, 16, 16
    x1 = jax.random.normal(k1, (N, CIN, H, W), dtype=jnp.float32)
    x2 = jax.random.normal(k2, (N, CIN, H, W), dtype=jnp.float32)

    # Conv2d(3, 8, 1) parameters: weight (Cout, Cin), PyTorch-style fan_in init.
    bound = 1.0 / (CIN ** 0.5)
    w1 = jax.random.uniform(kw1, (COUT, CIN), jnp.float32, -bound, bound)
    b1 = jax.random.uniform(kb1, (COUT,), jnp.float32, -bound, bound)
    w2 = jax.random.uniform(kw2, (COUT, CIN), jnp.float32, -bound, bound)
    b2 = jax.random.uniform(kb2, (COUT,), jnp.float32, -bound, bound)
    params = (w1, b1, w2, b2)

    out = jax.jit(model_forward)(x1, x2, params)
    out = jax.block_until_ready(out)

    ref = _reference(x1, x2, params)
    assert out.shape == (N, COUT, H + 2, W + 2), out.shape
    err = float(jnp.max(jnp.abs(out - ref)))
    assert jnp.allclose(out, ref, atol=1e-3, rtol=1e-3), f"mismatch vs reference, max err {err}"

    print("KERNEL_OK")
</pallas_src>

<mosaic_0001>
module attributes {stable_mosaic.version = 11 : i64} {
  func.func @_stats_kernel(%arg0: i32, %arg1: i32, %arg2: memref<1x3x256xf32, #tpu.memory_space<vmem>>, %arg3: memref<1x3x256xf32, #tpu.memory_space<vmem>>, %arg4: memref<8x3xf32, #tpu.memory_space<vmem>>, %arg5: memref<8x3xf32, #tpu.memory_space<vmem>>, %arg6: memref<8x1xf32, #tpu.memory_space<vmem>>, %arg7: memref<8x1xf32, #tpu.memory_space<vmem>>, %arg8: memref<8x1xf32, #tpu.memory_space<vmem>>, %arg9: memref<8x1xf32, #tpu.memory_space<vmem>>, %arg10: memref<8x1xf32, #tpu.memory_space<vmem>>) attributes {dimension_semantics = [#tpu.dimension_semantics<arbitrary>, #tpu.dimension_semantics<arbitrary>], iteration_bounds = array<i64: 2, 1>, scalar_prefetch = 0 : i64, scratch_operands = 0 : i64, tpu.core_type = #tpu.core_type<tc>, window_params = [{transform_indices = @transform_0, window_bounds = array<i64: 1, 3, 256>}, {transform_indices = @transform_1, window_bounds = array<i64: 1, 3, 256>}, {pipeline_mode = #tpu.pipeline_mode<synchronous>, transform_indices = @transform_2, window_bounds = array<i64: 8, 3>}, {pipeline_mode = #tpu.pipeline_mode<synchronous>, transform_indices = @transform_3, window_bounds = array<i64: 8, 3>}, {pipeline_mode = #tpu.pipeline_mode<synchronous>, transform_indices = @transform_4, window_bounds = array<i64: 8, 1>}, {pipeline_mode = #tpu.pipeline_mode<synchronous>, transform_indices = @transform_5, window_bounds = array<i64: 8, 1>}, {pipeline_mode = #tpu.pipeline_mode<synchronous>, transform_indices = @transform_6, window_bounds = array<i64: 8, 1>}, {pipeline_mode = #tpu.pipeline_mode<synchronous>, transform_indices = @transform_7, window_bounds = array<i64: 8, 1>}, {pipeline_mode = #tpu.pipeline_mode<synchronous>, transform_indices = @transform_8, window_bounds = array<i64: 8, 1>}]} {
    %c0_i32 = arith.constant 0 : i32
    %0 = arith.cmpi eq, %arg0, %c0_i32 : i32
    %c0_i32_0 = arith.constant 0 : i32
    %1 = arith.cmpi eq, %arg1, %c0_i32_0 : i32
    %2 = arith.andi %0, %1 : i1
    %3 = arith.extui %2 : i1 to i32
    %c0_i32_1 = arith.constant 0 : i32
    %4 = arith.cmpi ne, %3, %c0_i32_1 : i32
    scf.if %4 {
      %cst_35 = arith.constant 0.000000e+00 : f32
      %73 = vector.broadcast %cst_35 : f32 to vector<8x1xf32>
      %c0_36 = arith.constant 0 : index
      %c0_37 = arith.constant 0 : index
      %74 = vector.load %arg6[%c0_36, %c0_37] : memref<8x1xf32, #tpu.memory_space<vmem>>, vector<8x1xf32>
      tpu.vector_store %arg6[%c0_36, %c0_37], %73 {strides = array<i32>} : memref<8x1xf32, #tpu.memory_space<vmem>>, vector<8x1xf32>,
      %cst_38 = arith.constant 0.000000e+00 : f32
      %75 = vector.broadcast %cst_38 : f32 to vector<8x1xf32>
      %c0_39 = arith.constant 0 : index
      %c0_40 = arith.constant 0 : index
      %76 = vector.load %arg7[%c0_39, %c0_40] : memref<8x1xf32, #tpu.memory_space<vmem>>, vector<8x1xf32>
      tpu.vector_store %arg7[%c0_39, %c0_40], %75 {strides = array<i32>} : memref<8x1xf32, #tpu.memory_space<vmem>>, vector<8x1xf32>,
      %cst_41 = arith.constant 0.000000e+00 : f32
      %77 = vector.broadcast %cst_41 : f32 to vector<8x1xf32>
      %c0_42 = arith.constant 0 : index
      %c0_43 = arith.constant 0 : index
      %78 = vector.load %arg8[%c0_42, %c0_43] : memref<8x1xf32, #tpu.memory_space<vmem>>, vector<8x1xf32>
      tpu.vector_store %arg8[%c0_42, %c0_43], %77 {strides = array<i32>} : memref<8x1xf32, #tpu.memory_space<vmem>>, vector<8x1xf32>,
      %cst_44 = arith.constant 0.000000e+00 : f32
      %79 = vector.broadcast %cst_44 : f32 to vector<8x1xf32>
      %c0_45 = arith.constant 0 : index
      %c0_46 = arith.constant 0 : index
      %80 = vector.load %arg9[%c0_45, %c0_46] : memref<8x1xf32, #tpu.memory_space<vmem>>, vector<8x1xf32>
      tpu.vector_store %arg9[%c0_45, %c0_46], %79 {strides = array<i32>} : memref<8x1xf32, #tpu.memory_space<vmem>>, vector<8x1xf32>,
      %cst_47 = arith.constant 0.000000e+00 : f32
      %81 = vector.broadcast %cst_47 : f32 to vector<8x1xf32>
      %c0_48 = arith.constant 0 : index
      %c0_49 = arith.constant 0 : index
      %82 = vector.load %arg10[%c0_48, %c0_49] : memref<8x1xf32, #tpu.memory_space<vmem>>, vector<8x1xf32>
      tpu.vector_store %arg10[%c0_48, %c0_49], %81 {strides = array<i32>} : memref<8x1xf32, #tpu.memory_space<vmem>>, vector<8x1xf32>,
    } else {
    }
    %c0 = arith.constant 0 : index
    %c0_2 = arith.constant 0 : index
    %5 = vector.load %arg4[%c0, %c0_2] : memref<8x3xf32, #tpu.memory_space<vmem>>, vector<8x3xf32>
    %c0_3 = arith.constant 0 : index
    %c0_4 = arith.constant 0 : index
    %c0_5 = arith.constant 0 : index
    %6 = vector.load %arg2[%c0_3, %c0_4, %c0_5] : memref<1x3x256xf32, #tpu.memory_space<vmem>>, vector<1x3x256xf32>
    %7 = vector.shape_cast %6 : vector<1x3x256xf32> to vector<3x256xf32>
    %8 = vector.extract_strided_slice %5 {offsets = [0, 0], sizes = [8, 1], strides = [1, 1]} : vector<8x3xf32> to vector<8x1xf32>
    %9 = vector.extract_strided_slice %7 {offsets = [0, 0], sizes = [1, 256], strides = [1, 1]} : vector<3x256xf32> to vector<1x256xf32>
    %10 = vector.broadcast %8 : vector<8x1xf32> to vector<8x256xf32>
    %11 = vector.broadcast %9 : vector<1x256xf32> to vector<8x256xf32>
    %12 = arith.mulf %10, %11 : vector<8x256xf32>
    %13 = vector.extract_strided_slice %5 {offsets = [0, 1], sizes = [8, 1], strides = [1, 1]} : vector<8x3xf32> to vector<8x1xf32>
    %14 = vector.extract_strided_slice %7 {offsets = [1, 0], sizes = [1, 256], strides = [1, 1]} : vector<3x256xf32> to vector<1x256xf32>
    %15 = vector.broadcast %13 : vector<8x1xf32> to vector<8x256xf32>
    %16 = vector.broadcast %14 : vector<1x256xf32> to vector<8x256xf32>
    %17 = arith.mulf %15, %16 : vector<8x256xf32>
    %18 = arith.addf %12, %17 : vector<8x256xf32>
    %19 = vector.extract_strided_slice %5 {offsets = [0, 2], sizes = [8, 1], strides = [1, 1]} : vector<8x3xf32> to vector<8x1xf32>
    %20 = vector.extract_strided_slice %7 {offsets = [2, 0], sizes = [1, 256], strides = [1, 1]} : vector<3x256xf32> to vector<1x256xf32>
    %21 = vector.broadcast %19 : vector<8x1xf32> to vector<8x256xf32>
    %22 = vector.broadcast %20 : vector<1x256xf32> to vector<8x256xf32>
    %23 = arith.mulf %21, %22 : vector<8x256xf32>
    %24 = arith.addf %18, %23 : vector<8x256xf32>
    %c0_6 = arith.constant 0 : index
    %c0_7 = arith.constant 0 : index
    %25 = vector.load %arg5[%c0_6, %c0_7] : memref<8x3xf32, #tpu.memory_space<vmem>>, vector<8x3xf32>
    %c0_8 = arith.constant 0 : index
    %c0_9 = arith.constant 0 : index
    %c0_10 = arith.constant 0 : index
    %26 = vector.load %arg3[%c0_8, %c0_9, %c0_10] : memref<1x3x256xf32, #tpu.memory_space<vmem>>, vector<1x3x256xf32>
    %27 = vector.shape_cast %26 : vector<1x3x256xf32> to vector<3x256xf32>
    %28 = vector.extract_strided_slice %25 {offsets = [0, 0], sizes = [8, 1], strides = [1, 1]} : vector<8x3xf32> to vector<8x1xf32>
    %29 = vector.extract_strided_slice %27 {offsets = [0, 0], sizes = [1, 256], strides = [1, 1]} : vector<3x256xf32> to vector<1x256xf32>
    %30 = vector.broadcast %28 : vector<8x1xf32> to vector<8x256xf32>
    %31 = vector.broadcast %29 : vector<1x256xf32> to vector<8x256xf32>
    %32 = arith.mulf %30, %31 : vector<8x256xf32>
    %33 = vector.extract_strided_slice %25 {offsets = [0, 1], sizes = [8, 1], strides = [1, 1]} : vector<8x3xf32> to vector<8x1xf32>
    %34 = vector.extract_strided_slice %27 {offsets = [1, 0], sizes = [1, 256], strides = [1, 1]} : vector<3x256xf32> to vector<1x256xf32>
    %35 = vector.broadcast %33 : vector<8x1xf32> to vector<8x256xf32>
    %36 = vector.broadcast %34 : vector<1x256xf32> to vector<8x256xf32>
    %37 = arith.mulf %35, %36 : vector<8x256xf32>
    %38 = arith.addf %32, %37 : vector<8x256xf32>
    %39 = vector.extract_strided_slice %25 {offsets = [0, 2], sizes = [8, 1], strides = [1, 1]} : vector<8x3xf32> to vector<8x1xf32>
    %40 = vector.extract_strided_slice %27 {offsets = [2, 0], sizes = [1, 256], strides = [1, 1]} : vector<3x256xf32> to vector<1x256xf32>
    %41 = vector.broadcast %39 : vector<8x1xf32> to vector<8x256xf32>
    %42 = vector.broadcast %40 : vector<1x256xf32> to vector<8x256xf32>
    %43 = arith.mulf %41, %42 : vector<8x256xf32>
    %44 = arith.addf %38, %43 : vector<8x256xf32>
    %c0_11 = arith.constant 0 : index
    %c0_12 = arith.constant 0 : index
    %45 = vector.load %arg6[%c0_11, %c0_12] : memref<8x1xf32, #tpu.memory_space<vmem>>, vector<8x1xf32>
    %cst = arith.constant dense<0.000000e+00> : vector<8xf32>
    %46 = vector.multi_reduction <add>, %24, %cst [1] : vector<8x256xf32> to vector<8xf32>
    %47 = vector.shape_cast %46 : vector<8xf32> to vector<8x1xf32>
    %48 = arith.addf %45, %47 : vector<8x1xf32>
    %c0_13 = arith.constant 0 : index
    %c0_14 = arith.constant 0 : index
    %49 = vector.load %arg6[%c0_13, %c0_14] : memref<8x1xf32, #tpu.memory_space<vmem>>, vector<8x1xf32>
    tpu.vector_store %arg6[%c0_13, %c0_14], %48 {strides = array<i32>} : memref<8x1xf32, #tpu.memory_space<vmem>>, vector<8x1xf32>,
    %c0_15 = arith.constant 0 : index
    %c0_16 = arith.constant 0 : index
    %50 = vector.load %arg7[%c0_15, %c0_16] : memref<8x1xf32, #tpu.memory_space<vmem>>, vector<8x1xf32>
    %51 = arith.mulf %24, %24 : vector<8x256xf32>
    %cst_17 = arith.constant dense<0.000000e+00> : vector<8xf32>
    %52 = vector.multi_reduction <add>, %51, %cst_17 [1] : vector<8x256xf32> to vector<8xf32>
    %53 = vector.shape_cast %52 : vector<8xf32> to vector<8x1xf32>
    %54 = arith.addf %50, %53 : vector<8x1xf32>
    %c0_18 = arith.constant 0 : index
    %c0_19 = arith.constant 0 : index
    %55 = vector.load %arg7[%c0_18, %c0_19] : memref<8x1xf32, #tpu.memory_space<vmem>>, vector<8x1xf32>
    tpu.vector_store %arg7[%c0_18, %c0_19], %54 {strides = array<i32>} : memref<8x1xf32, #tpu.memory_space<vmem>>, vector<8x1xf32>,
    %c0_20 = arith.constant 0 : index
    %c0_21 = arith.constant 0 : index
    %56 = vector.load %arg8[%c0_20, %c0_21] : memref<8x1xf32, #tpu.memory_space<vmem>>, vector<8x1xf32>
    %cst_22 = arith.constant dense<0.000000e+00> : vector<8xf32>
    %57 = vector.multi_reduction <add>, %44, %cst_22 [1] : vector<8x256xf32> to vector<8xf32>
    %58 = vector.shape_cast %57 : vector<8xf32> to vector<8x1xf32>
    %59 = arith.addf %56, %58 : vector<8x1xf32>
    %c0_23 = arith.constant 0 : index
    %c0_24 = arith.constant 0 : index
    %60 = vector.load %arg8[%c0_23, %c0_24] : memref<8x1xf32, #tpu.memory_space<vmem>>, vector<8x1xf32>
    tpu.vector_store %arg8[%c0_23, %c0_24], %59 {strides = array<i32>} : memref<8x1xf32, #tpu.memory_space<vmem>>, vector<8x1xf32>,
    %c0_25 = arith.constant 0 : index
    %c0_26 = arith.constant 0 : index
    %61 = vector.load %arg9[%c0_25, %c0_26] : memref<8x1xf32, #tpu.memory_space<vmem>>, vector<8x1xf32>
    %62 = arith.mulf %44, %44 : vector<8x256xf32>
    %cst_27 = arith.constant dense<0.000000e+00> : vector<8xf32>
    %63 = vector.multi_reduction <add>, %62, %cst_27 [1] : vector<8x256xf32> to vector<8xf32>
    %64 = vector.shape_cast %63 : vector<8xf32> to vector<8x1xf32>
    %65 = arith.addf %61, %64 : vector<8x1xf32>
    %c0_28 = arith.constant 0 : index
    %c0_29 = arith.constant 0 : index
    %66 = vector.load %arg9[%c0_28, %c0_29] : memref<8x1xf32, #tpu.memory_space<vmem>>, vector<8x1xf32>
    tpu.vector_store %arg9[%c0_28, %c0_29], %65 {strides = array<i32>} : memref<8x1xf32, #tpu.memory_space<vmem>>, vector<8x1xf32>,
    %c0_30 = arith.constant 0 : index
    %c0_31 = arith.constant 0 : index
    %67 = vector.load %arg10[%c0_30, %c0_31] : memref<8x1xf32, #tpu.memory_space<vmem>>, vector<8x1xf32>
    %68 = arith.mulf %24, %44 : vector<8x256xf32>
    %cst_32 = arith.constant dense<0.000000e+00> : vector<8xf32>
    %69 = vector.multi_reduction <add>, %68, %cst_32 [1] : vector<8x256xf32> to vector<8xf32>
    %70 = vector.shape_cast %69 : vector<8xf32> to vector<8x1xf32>
    %71 = arith.addf %67, %70 : vector<8x1xf32>
    %c0_33 = arith.constant 0 : index
    %c0_34 = arith.constant 0 : index
    %72 = vector.load %arg10[%c0_33, %c0_34] : memref<8x1xf32, #tpu.memory_space<vmem>>, vector<8x1xf32>
    tpu.vector_store %arg10[%c0_33, %c0_34], %71 {strides = array<i32>} : memref<8x1xf32, #tpu.memory_space<vmem>>, vector<8x1xf32>,
    return
  }
  func.func @transform_0(%arg0: i32, %arg1: i32) -> (i32, i32, i32) {
    %c0_i32 = arith.constant 0 : i32
    %c0_i32_0 = arith.constant 0 : i32
    return %arg0, %c0_i32, %arg1 : i32, i32, i32
  }
  func.func @transform_1(%arg0: i32, %arg1: i32) -> (i32, i32, i32) {
    %c0_i32 = arith.constant 0 : i32
    %c0_i32_0 = arith.constant 0 : i32
    return %arg0, %c0_i32, %arg1 : i32, i32, i32
  }
  func.func @transform_2(%arg0: i32, %arg1: i32) -> (i32, i32) {
    %c0_i32 = arith.constant 0 : i32
    %c0_i32_0 = arith.constant 0 : i32
    %c0_i32_1 = arith.constant 0 : i32
    return %c0_i32, %c0_i32_0 : i32, i32
  }
  func.func @transform_3(%arg0: i32, %arg1: i32) -> (i32, i32) {
    %c0_i32 = arith.constant 0 : i32
    %c0_i32_0 = arith.constant 0 : i32
    %c0_i32_1 = arith.constant 0 : i32
    return %c0_i32, %c0_i32_0 : i32, i32
  }
  func.func @transform_4(%arg0: i32, %arg1: i32) -> (i32, i32) {
    %c0_i32 = arith.constant 0 : i32
    %c0_i32_0 = arith.constant 0 : i32
    %c0_i32_1 = arith.constant 0 : i32
    return %c0_i32, %c0_i32_0 : i32, i32
  }
  func.func @transform_5(%arg0: i32, %arg1: i32) -> (i32, i32) {
    %c0_i32 = arith.constant 0 : i32
    %c0_i32_0 = arith.constant 0 : i32
    %c0_i32_1 = arith.constant 0 : i32
    return %c0_i32, %c0_i32_0 : i32, i32
  }
  func.func @transform_6(%arg0: i32, %arg1: i32) -> (i32, i32) {
    %c0_i32 = arith.constant 0 : i32
    %c0_i32_0 = arith.constant 0 : i32
    %c0_i32_1 = arith.constant 0 : i32
    return %c0_i32, %c0_i32_0 : i32, i32
  }
  func.func @transform_7(%arg0: i32, %arg1: i32) -> (i32, i32) {
    %c0_i32 = arith.constant 0 : i32
    %c0_i32_0 = arith.constant 0 : i32
    %c0_i32_1 = arith.constant 0 : i32
    return %c0_i32, %c0_i32_0 : i32, i32
  }
  func.func @transform_8(%arg0: i32, %arg1: i32) -> (i32, i32) {
    %c0_i32 = arith.constant 0 : i32
    %c0_i32_0 = arith.constant 0 : i32
    %c0_i32_1 = arith.constant 0 : i32
    return %c0_i32, %c0_i32_0 : i32, i32
  }
}

module attributes {stable_mosaic.version = 11 : i64} {
  func.func @_apply_kernel(%arg0: i32, %arg1: i32, %arg2: memref<1x3x256xf32, #tpu.memory_space<vmem>>, %arg3: memref<1x3x256xf32, #tpu.memory_space<vmem>>, %arg4: memref<8x3xf32, #tpu.memory_space<vmem>>, %arg5: memref<8x3xf32, #tpu.memory_space<vmem>>, %arg6: memref<8x1xf32, #tpu.memory_space<vmem>>, %arg7: memref<1x8x256xf32, #tpu.memory_space<vmem>>) attributes {dimension_semantics = [#tpu.dimension_semantics<parallel>, #tpu.dimension_semantics<parallel>], iteration_bounds = array<i64: 2, 1>, scalar_prefetch = 0 : i64, scratch_operands = 0 : i64, tpu.core_type = #tpu.core_type<tc>, window_params = [{transform_indices = @transform_0, window_bounds = array<i64: 1, 3, 256>}, {transform_indices = @transform_1, window_bounds = array<i64: 1, 3, 256>}, {pipeline_mode = #tpu.pipeline_mode<synchronous>, transform_indices = @transform_2, window_bounds = array<i64: 8, 3>}, {pipeline_mode = #tpu.pipeline_mode<synchronous>, transform_indices = @transform_3, window_bounds = array<i64: 8, 3>}, {pipeline_mode = #tpu.pipeline_mode<synchronous>, transform_indices = @transform_4, window_bounds = array<i64: 8, 1>}, {transform_indices = @transform_5, window_bounds = array<i64: 1, 8, 256>}]} {
    %c0 = arith.constant 0 : index
    %c0_0 = arith.constant 0 : index
    %0 = vector.load %arg4[%c0, %c0_0] : memref<8x3xf32, #tpu.memory_space<vmem>>, vector<8x3xf32>
    %c0_1 = arith.constant 0 : index
    %c0_2 = arith.constant 0 : index
    %c0_3 = arith.constant 0 : index
    %1 = vector.load %arg2[%c0_1, %c0_2, %c0_3] : memref<1x3x256xf32, #tpu.memory_space<vmem>>, vector<1x3x256xf32>
    %2 = vector.shape_cast %1 : vector<1x3x256xf32> to vector<3x256xf32>
    %3 = vector.extract_strided_slice %0 {offsets = [0, 0], sizes = [8, 1], strides = [1, 1]} : vector<8x3xf32> to vector<8x1xf32>
    %4 = vector.extract_strided_slice %2 {offsets = [0, 0], sizes = [1, 256], strides = [1, 1]} : vector<3x256xf32> to vector<1x256xf32>
    %5 = vector.broadcast %3 : vector<8x1xf32> to vector<8x256xf32>
    %6 = vector.broadcast %4 : vector<1x256xf32> to vector<8x256xf32>
    %7 = arith.mulf %5, %6 : vector<8x256xf32>
    %8 = vector.extract_strided_slice %0 {offsets = [0, 1], sizes = [8, 1], strides = [1, 1]} : vector<8x3xf32> to vector<8x1xf32>
    %9 = vector.extract_strided_slice %2 {offsets = [1, 0], sizes = [1, 256], strides = [1, 1]} : vector<3x256xf32> to vector<1x256xf32>
    %10 = vector.broadcast %8 : vector<8x1xf32> to vector<8x256xf32>
    %11 = vector.broadcast %9 : vector<1x256xf32> to vector<8x256xf32>
    %12 = arith.mulf %10, %11 : vector<8x256xf32>
    %13 = arith.addf %7, %12 : vector<8x256xf32>
    %14 = vector.extract_strided_slice %0 {offsets = [0, 2], sizes = [8, 1], strides = [1, 1]} : vector<8x3xf32> to vector<8x1xf32>
    %15 = vector.extract_strided_slice %2 {offsets = [2, 0], sizes = [1, 256], strides = [1, 1]} : vector<3x256xf32> to vector<1x256xf32>
    %16 = vector.broadcast %14 : vector<8x1xf32> to vector<8x256xf32>
    %17 = vector.broadcast %15 : vector<1x256xf32> to vector<8x256xf32>
    %18 = arith.mulf %16, %17 : vector<8x256xf32>
    %19 = arith.addf %13, %18 : vector<8x256xf32>
    %c0_4 = arith.constant 0 : index
    %c0_5 = arith.constant 0 : index
    %20 = vector.load %arg5[%c0_4, %c0_5] : memref<8x3xf32, #tpu.memory_space<vmem>>, vector<8x3xf32>
    %c0_6 = arith.constant 0 : index
    %c0_7 = arith.constant 0 : index
    %c0_8 = arith.constant 0 : index
    %21 = vector.load %arg3[%c0_6, %c0_7, %c0_8] : memref<1x3x256xf32, #tpu.memory_space<vmem>>, vector<1x3x256xf32>
    %22 = vector.shape_cast %21 : vector<1x3x256xf32> to vector<3x256xf32>
    %23 = vector.extract_strided_slice %20 {offsets = [0, 0], sizes = [8, 1], strides = [1, 1]} : vector<8x3xf32> to vector<8x1xf32>
    %24 = vector.extract_strided_slice %22 {offsets = [0, 0], sizes = [1, 256], strides = [1, 1]} : vector<3x256xf32> to vector<1x256xf32>
    %25 = vector.broadcast %23 : vector<8x1xf32> to vector<8x256xf32>
    %26 = vector.broadcast %24 : vector<1x256xf32> to vector<8x256xf32>
    %27 = arith.mulf %25, %26 : vector<8x256xf32>
    %28 = vector.extract_strided_slice %20 {offsets = [0, 1], sizes = [8, 1], strides = [1, 1]} : vector<8x3xf32> to vector<8x1xf32>
    %29 = vector.extract_strided_slice %22 {offsets = [1, 0], sizes = [1, 256], strides = [1, 1]} : vector<3x256xf32> to vector<1x256xf32>
    %30 = vector.broadcast %28 : vector<8x1xf32> to vector<8x256xf32>
    %31 = vector.broadcast %29 : vector<1x256xf32> to vector<8x256xf32>
    %32 = arith.mulf %30, %31 : vector<8x256xf32>
    %33 = arith.addf %27, %32 : vector<8x256xf32>
    %34 = vector.extract_strided_slice %20 {offsets = [0, 2], sizes = [8, 1], strides = [1, 1]} : vector<8x3xf32> to vector<8x1xf32>
    %35 = vector.extract_strided_slice %22 {offsets = [2, 0], sizes = [1, 256], strides = [1, 1]} : vector<3x256xf32> to vector<1x256xf32>
    %36 = vector.broadcast %34 : vector<8x1xf32> to vector<8x256xf32>
    %37 = vector.broadcast %35 : vector<1x256xf32> to vector<8x256xf32>
    %38 = arith.mulf %36, %37 : vector<8x256xf32>
    %39 = arith.addf %33, %38 : vector<8x256xf32>
    %40 = arith.addf %19, %39 : vector<8x256xf32>
    %c0_9 = arith.constant 0 : index
    %c0_10 = arith.constant 0 : index
    %41 = vector.load %arg6[%c0_9, %c0_10] : memref<8x1xf32, #tpu.memory_space<vmem>>, vector<8x1xf32>
    %42 = vector.broadcast %41 : vector<8x1xf32> to vector<8x256xf32>
    %43 = arith.addf %40, %42 : vector<8x256xf32>
    %c0_11 = arith.constant 0 : index
    %c0_12 = arith.constant 0 : index
    %c0_13 = arith.constant 0 : index
    %44 = vector.load %arg7[%c0_11, %c0_12, %c0_13] : memref<1x8x256xf32, #tpu.memory_space<vmem>>, vector<1x8x256xf32>
    %45 = vector.shape_cast %44 : vector<1x8x256xf32> to vector<8x256xf32>
    %46 = vector.shape_cast %43 : vector<8x256xf32> to vector<1x8x256xf32>
    tpu.vector_store %arg7[%c0_11, %c0_12, %c0_13], %46 {strides = array<i32>} : memref<1x8x256xf32, #tpu.memory_space<vmem>>, vector<1x8x256xf32>,
    return
  }
  func.func @transform_0(%arg0: i32, %arg1: i32) -> (i32, i32, i32) {
    %c0_i32 = arith.constant 0 : i32
    %c0_i32_0 = arith.constant 0 : i32
    return %arg0, %c0_i32, %arg1 : i32, i32, i32
  }
  func.func @transform_1(%arg0: i32, %arg1: i32) -> (i32, i32, i32) {
    %c0_i32 = arith.constant 0 : i32
    %c0_i32_0 = arith.constant 0 : i32
    return %arg0, %c0_i32, %arg1 : i32, i32, i32
  }
  func.func @transform_2(%arg0: i32, %arg1: i32) -> (i32, i32) {
    %c0_i32 = arith.constant 0 : i32
    %c0_i32_0 = arith.constant 0 : i32
    %c0_i32_1 = arith.constant 0 : i32
    return %c0_i32, %c0_i32_0 : i32, i32
  }
  func.func @transform_3(%arg0: i32, %arg1: i32) -> (i32, i32) {
    %c0_i32 = arith.constant 0 : i32
    %c0_i32_0 = arith.constant 0 : i32
    %c0_i32_1 = arith.constant 0 : i32
    return %c0_i32, %c0_i32_0 : i32, i32
  }
  func.func @transform_4(%arg0: i32, %arg1: i32) -> (i32, i32) {
    %c0_i32 = arith.constant 0 : i32
    %c0_i32_0 = arith.constant 0 : i32
    %c0_i32_1 = arith.constant 0 : i32
    return %c0_i32, %c0_i32_0 : i32, i32
  }
  func.func @transform_5(%arg0: i32, %arg1: i32) -> (i32, i32, i32) {
    %c0_i32 = arith.constant 0 : i32
    %c0_i32_0 = arith.constant 0 : i32
    return %arg0, %c0_i32, %arg1 : i32, i32, i32
  }
}

</mosaic_0001>

<llo_original>
// kernel: model_forward.3
$region0: #{model_forward.3}
  #allocation0 [shape = 'u32[]', space=smem, size = 0x4, offset = 0x4, fixed_abs, tag = 'smem constant byte address 0x4 - core index']
  #allocation1 [shape = 'u32[144,128]{1,0:T(1,128)}', space=vmem, size = 0x12000, scoped, tag = 'internal scratch']
  %s0 = inlined_call_operand.vmem [shape: f32[2,3,256], index: 0, kind: input, shape index: {}]
  %s1 = inlined_call_operand.vmem [shape: f32[2,3,256], index: 1, kind: input, shape index: {}]
  %s2 = inlined_call_operand.vmem [shape: f32[8,3], index: 2, kind: input, shape index: {}]
  %s3 = inlined_call_operand.vmem [shape: f32[8,3], index: 3, kind: input, shape index: {}]
  %s4 = inlined_call_operand.vmem [shape: f32[8,1], index: 4, kind: input, shape index: {}]
  %s5 = inlined_call_operand.vmem [shape: f32[2,8,256], index: 5, kind: output, shape index: {}]
  %s6 = sld [smem:[#allocation0]]
  $region53: #{model_forward.3} parent=0
    _
  %s8 = ssub.s32 1, %s6
  %s9 = scalar_select 0, %s8, %s6
  loop: start=0, step=1, limit=4
  $region2: #{model_forward.3} parent=0 // loop_pre_header
    _
  $region3: #{model_forward.3} parent=0 // loop_header
    %s11 = sphi 0, %s15
    %p12 = scmp.ge.s32.totalorder %s11, 4
    %s18 = sphi 0, %s30
    %s19 = sphi 0, %s26
    %s20 = sphi 0, %s18
    %s21 = sphi 0, %s19
    %s22 = sphi 0, %s20
    %s23 = sphi 0, %s21
    %s35 = sphi 0, %s37
    %s38 = sphi 0, %s35
    %s39 = sphi 0, %s38
    %s55 = sphi 0, %s39
    %s63 = sphi 0, %s65
    %s66 = sphi 0, %s63
    %s67 = sphi 0, %s66
    %s83 = sphi 0, %s67
    %s87 = sphi 0, %s87
    %s89 = sphi 0, %s87
    %s90 = sphi 0, %s89
    %s104 = sphi 0, %s90
    %s108 = sphi 0, %s108
    %s110 = sphi 0, %s108
    %s111 = sphi 0, %s110
    %s125 = sphi 0, %s111
    %s129 = sphi 0, %s129
    %s131 = sphi 0, %s129
    %s132 = sphi 0, %s131
    %s146 = sphi 0, %s132
    %s154 = sphi 0, %s156
    %s157 = sphi 0, %s154
    %s158 = sphi 0, %s157
    %s174 = sphi 0, %s158
  $region4: #{model_forward.3} parent=0 // loop_header_branch
    %14 = sbr.rel (%p12) target = $region8
  $region5: #{model_forward.3} parent=0 // loop_body
    %s16 = ssub.s32 %s11, 1
    %s17 = ssub.s32 %s11, 2
    %s24 = sadd.s32 1, %s19
    %p25 = scmp.ge.s32.totalorder %s24, 1
    %s26 = scalar_select %p25, 0, %s24
    %s27 = sadd.s32 1, %s18
    %s28 = scalar_select %p25, %s27, %s18
    %p29 = scmp.ge.s32.totalorder %s28, 2
    %s30 = scalar_select %p29, 0, %s28
    %s31 = ssub.s32 %s18, %s30
    %s32 = ssub.s32 %s19, %s26
    %s33 = sor.u32 %s31, %s32
    %p34 = scmp.eq.s32.totalorder %s33, 0
    %s36 = sadd.s32 %s35, 1
    %s37 = scalar_select %p34, %s35, %s36
    %p40 = pneg %p34
    %p41 = scmp.eq.s32.totalorder %s11, 1
    %p42 = por %p40, %p41
    %p43 = scmp.ne.s32.totalorder %s35, %s38
    %p44 = scmp.eq.s32.totalorder %s11, 0
    %p45 = por %p43, %p44
    %p46 = scmp.ne.s32.totalorder %s35, %s38
    %p47 = scmp.eq.s32.totalorder %s16, 1
    %p48 = por %p46, %p47
    %p49 = scmp.ne.s32.totalorder %s38, %s39
    %p50 = scmp.eq.s32.totalorder %s16, 0
    %p51 = por %p49, %p50
    %p52 = scmp.ne.s32.totalorder %s38, %s39
    %p53 = scmp.eq.s32.totalorder %s17, 1
    %p54 = por %p52, %p53
    %p56 = scmp.ne.s32.totalorder %s39, %s55
    %p57 = scmp.eq.s32.totalorder %s17, 0
    %p58 = por %p56, %p57
    %s59 = ssub.s32 %s18, %s30
    %s60 = ssub.s32 %s19, %s26
    %s61 = sor.u32 %s59, %s60
    %p62 = scmp.eq.s32.totalorder %s61, 0
    %s64 = sadd.s32 %s63, 1
    %s65 = scalar_select %p62, %s63, %s64
    %p68 = pneg %p62
    %p69 = scmp.eq.s32.totalorder %s11, 1
    %p70 = por %p68, %p69
    %p71 = scmp.ne.s32.totalorder %s63, %s66
    %p72 = scmp.eq.s32.totalorder %s11, 0
    %p73 = por %p71, %p72
    %p74 = scmp.ne.s32.totalorder %s63, %s66
    %p75 = scmp.eq.s32.totalorder %s16, 1
    %p76 = por %p74, %p75
    %p77 = scmp.ne.s32.totalorder %s66, %s67
    %p78 = scmp.eq.s32.totalorder %s16, 0
    %p79 = por %p77, %p78
    %p80 = scmp.ne.s32.totalorder %s66, %s67
    %p81 = scmp.eq.s32.totalorder %s17, 1
    %p82 = por %p80, %p81
    %p84 = scmp.ne.s32.totalorder %s67, %s83
    %p85 = scmp.eq.s32.totalorder %s17, 0
    %p86 = por %p84, %p85
    %s88 = sadd.s32 %s87, 1
    %p91 = scmp.eq.s32.totalorder %s11, 1
    %p92 = scmp.ne.s32.totalorder %s87, %s89
    %p93 = scmp.eq.s32.totalorder %s11, 0
    %p94 = por %p92, %p93
    %p95 = scmp.ne.s32.totalorder %s87, %s89
    %p96 = scmp.eq.s32.totalorder %s16, 1
    %p97 = por %p95, %p96
    %p98 = scmp.ne.s32.totalorder %s89, %s90
    %p99 = scmp.eq.s32.totalorder %s16, 0
    %p100 = por %p98, %p99
    %p101 = scmp.ne.s32.totalorder %s89, %s90
    %p102 = scmp.eq.s32.totalorder %s17, 1
    %p103 = por %p101, %p102
    %p105 = scmp.ne.s32.totalorder %s90, %s104
    %p106 = scmp.eq.s32.totalorder %s17, 0
    %p107 = por %p105, %p106
    %s109 = sadd.s32 %s108, 1
    %p112 = scmp.eq.s32.totalorder %s11, 1
    %p113 = scmp.ne.s32.totalorder %s108, %s110
    %p114 = scmp.eq.s32.totalorder %s11, 0
    %p115 = por %p113, %p114
    %p116 = scmp.ne.s32.totalorder %s108, %s110
    %p117 = scmp.eq.s32.totalorder %s16, 1
    %p118 = por %p116, %p117
    %p119 = scmp.ne.s32.totalorder %s110, %s111
    %p120 = scmp.eq.s32.totalorder %s16, 0
    %p121 = por %p119, %p120
    %p122 = scmp.ne.s32.totalorder %s110, %s111
    %p123 = scmp.eq.s32.totalorder %s17, 1
    %p124 = por %p122, %p123
    %p126 = scmp.ne.s32.totalorder %s111, %s125
    %p127 = scmp.eq.s32.totalorder %s17, 0
    %p128 = por %p126, %p127
    %s130 = sadd.s32 %s129, 1
    %p133 = scmp.eq.s32.totalorder %s11, 1
    %p134 = scmp.ne.s32.totalorder %s129, %s131
    %p135 = scmp.eq.s32.totalorder %s11, 0
    %p136 = por %p134, %p135
    %p137 = scmp.ne.s32.totalorder %s129, %s131
    %p138 = scmp.eq.s32.totalorder %s16, 1
    %p139 = por %p137, %p138
    %p140 = scmp.ne.s32.totalorder %s131, %s132
    %p141 = scmp.eq.s32.totalorder %s16, 0
    %p142 = por %p140, %p141
    %p143 = scmp.ne.s32.totalorder %s131, %s132
    %p144 = scmp.eq.s32.totalorder %s17, 1
    %p145 = por %p143, %p144
    %p147 = scmp.ne.s32.totalorder %s132, %s146
    %p148 = scmp.eq.s32.totalorder %s17, 0
    %p149 = por %p147, %p148
    %s150 = ssub.s32 %s18, %s30
    %s151 = ssub.s32 %s19, %s26
    %s152 = sor.u32 %s150, %s151
    %p153 = scmp.eq.s32.totalorder %s152, 0
    %s155 = sadd.s32 %s154, 1
    %s156 = scalar_select %p153, %s154, %s155
    %p159 = pneg %p153
    %p160 = scmp.eq.s32.totalorder %s11, 1
    %p161 = por %p159, %p160
    %p162 = scmp.ne.s32.totalorder %s154, %s157
    %p163 = scmp.eq.s32.totalorder %s11, 0
    %p164 = por %p162, %p163
    %p165 = scmp.ne.s32.totalorder %s154, %s157
    %p166 = scmp.eq.s32.totalorder %s16, 1
    %p167 = por %p165, %p166
    %p168 = scmp.ne.s32.totalorder %s157, %s158
    %p169 = scmp.eq.s32.totalorder %s16, 0
    %p170 = por %p168, %p169
    %p171 = scmp.ne.s32.totalorder %s157, %s158
    %p172 = scmp.eq.s32.totalorder %s17, 1
    %p173 = por %p171, %p172
    %p175 = scmp.ne.s32.totalorder %s158, %s174
    %p176 = scmp.eq.s32.totalorder %s17, 0
    %p177 = por %p175, %p176
    %p178 = scmp.le.s32.totalorder 1, %s11
    %p179 = scmp.lt.s32.totalorder %s11, 3
    %p180 = pnand %p178, %p179
    %p181 = pneg %p180
    // Predicated region
    $region9: #{model_forward.3} parent=5 // pred_check
      _
    $region10: #{model_forward.3} parent=5 // pred_check_branch
      %183 = sbr.rel (%p180) target = $region12
    $region11: #{model_forward.3} parent=5 // pred_region
      %s184 = ssub.s32 %s11, 1
      // Predicated region
      $region13: #{model_forward.3} parent=11 // pred_check
        %p185 = pneg %p100
      $region14: #{model_forward.3} parent=11 // pred_check_branch
        %187 = sbr.rel (%p185) target = $region16
      $region15: #{model_forward.3} parent=11 // pred_region
        _
      $region16: #{model_forward.3} parent=11 // pred_fallthru
        _
      // Predicated region
      $region17: #{model_forward.3} parent=11 // pred_check
        %p188 = pneg %p121
      $region18: #{model_forward.3} parent=11 // pred_check_branch
        %190 = sbr.rel (%p188) target = $region20
      $region19: #{model_forward.3} parent=11 // pred_region
        _
      $region20: #{model_forward.3} parent=11 // pred_fallthru
        _
      // Predicated region
      $region21: #{model_forward.3} parent=11 // pred_check
        %p191 = pneg %p142
      $region22: #{model_forward.3} parent=11 // pred_check_branch
        %193 = sbr.rel (%p191) target = $region24
      $region23: #{model_forward.3} parent=11 // pred_region
        _
      $region24: #{model_forward.3} parent=11 // pred_fallthru
        _
    $region12: #{model_forward.3} parent=5 // pred_fallthru
      _
    %p194 = scmp.lt.s32.totalorder %s11, 2
    // Predicated region
    $region25: #{model_forward.3} parent=5 // pred_check
      %p195 = pneg %p194
    $region26: #{model_forward.3} parent=5 // pred_check_branch
      %197 = sbr.rel (%p195) target = $region28
    $region27: #{model_forward.3} parent=5 // pred_region
      // Predicated region
      $region29: #{model_forward.3} parent=27 // pred_check
        %p198 = pneg %p45
      $region30: #{model_forward.3} parent=27 // pred_check_branch
        %200 = sbr.rel (%p198) target = $region32
      $region31: #{model_forward.3} parent=27 // pred_region
        %s201 = smul.u32 2, %s19
        %p202 = scmp.lt.s32.totalorder %s18, 1
        %s203 = scalar_select %p202, %s18, 1
        %p204 = scmp.lt.s32.totalorder %s201, 1
        %s205 = scalar_select %p204, %s201, 1
        %s206 = smul.addr %s203, 2
        %s207 = sadd.s32 %s205, %s206
        %s208 = smul.addr %s207, 4
        %s209 = scalar_lea.vmem %s0, %s208
        %s210 = smul.u32 2, %s19
      $region32: #{model_forward.3} parent=27 // pred_fallthru
        _
      // Predicated region
      $region33: #{model_forward.3} parent=27 // pred_check
        %p211 = pneg %p73
      $region34: #{model_forward.3} parent=27 // pred_check_branch
        %213 = sbr.rel (%p211) target = $region36
      $region35: #{model_forward.3} parent=27 // pred_region
        %s214 = smul.u32 2, %s19
        %p215 = scmp.lt.s32.totalorder %s18, 1
        %s216 = scalar_select %p215, %s18, 1
        %p217 = scmp.lt.s32.totalorder %s214, 1
        %s218 = scalar_select %p217, %s214, 1
        %s219 = smul.addr %s216, 2
        %s220 = sadd.s32 %s218, %s219
        %s221 = smul.addr %s220, 4
        %s222 = scalar_lea.vmem %s1, %s221
        %s223 = smul.u32 2, %s19
      $region36: #{model_forward.3} parent=27 // pred_fallthru
        _
    $region28: #{model_forward.3} parent=5 // pred_fallthru
      _
    %p224 = scmp.le.s32.totalorder 1, %s11
    %p225 = scmp.lt.s32.totalorder %s11, 3
    %p226 = pnand %p224, %p225
    %p227 = pneg %p226
    // Predicated region
    $region37: #{model_forward.3} parent=5 // pred_check
      _
    $region38: #{model_forward.3} parent=5 // pred_check_branch
      %229 = sbr.rel (%p226) target = $region40
    $region39: #{model_forward.3} parent=5 // pred_region
      %s230 = ssub.s32 %s11, 1
      %s231 = smul.u32 2, %s21
      %p232 = scmp.lt.s32.totalorder %s20, 1
      %s233 = scalar_select %p232, %s20, 1
      %p234 = scmp.lt.s32.totalorder %s231, 1
      %s235 = scalar_select %p234, %s231, 1
      %s236 = smul.addr %s233, 2
      %s237 = sadd.s32 %s235, %s236
      %s238 = smul.addr %s237, 4
      %s239 = scalar_lea.vmem %s0, %s238
      %p240 = pneg %p51
      %p241 = pneg %p48
      %s242 = smul.u32 2, %s21
      %p243 = scmp.lt.s32.totalorder %s20, 1
      %s244 = scalar_select %p243, %s20, 1
      %p245 = scmp.lt.s32.totalorder %s242, 1
      %s246 = scalar_select %p245, %s242, 1
      %s247 = smul.addr %s244, 2
      %s248 = sadd.s32 %s246, %s247
      %s249 = smul.addr %s248, 4
      %s250 = scalar_lea.vmem %s1, %s249
      %p251 = pneg %p79
      %p252 = pneg %p76
      %p253 = pneg %p100
      %p254 = pneg %p97
      %p255 = pneg %p121
      %p256 = pneg %p118
      %p257 = pneg %p142
      %p258 = pneg %p139
      %p259 = pneg %p170
      %p260 = pneg %p167
      %s261 = smul.u32 2, %s21
      %p262 = scmp.lt.s32.totalorder %s20, 1
      %s263 = scalar_select %p262, %s20, 1
      %p264 = scmp.lt.s32.totalorder %s261, 1
      %s265 = scalar_select %p264, %s261, 1
      %s266 = smul.addr %s263, 2
      %s267 = sadd.s32 %s265, %s266
      %s268 = smul.addr %s267, 8
      %s269 = scalar_lea.vmem %s5, %s268
      %s270 = smul.u32 2, %s21
      %p271 = scmp.lt.s32.totalorder %s20, 1
      %s272 = scalar_select %p271, %s20, 1
      %p273 = scmp.lt.s32.totalorder %s270, 1
      %s274 = scalar_select %p273, %s270, 1
      %s275 = smul.addr %s272, 2
      %s276 = sadd.s32 %s274, %s275
      %s277 = smul.addr %s276, 4
      %s278 = scalar_lea.vmem %s0, %s277
      %s279 = smul.u32 2, %s21
      %s280 = smul.u32 2, %s21
      %p281 = scmp.lt.s32.totalorder %s20, 1
      %s282 = scalar_select %p281, %s20, 1
      %p283 = scmp.lt.s32.totalorder %s280, 1
      %s284 = scalar_select %p283, %s280, 1
      %s285 = smul.addr %s282, 2
      %s286 = sadd.s32 %s284, %s285
      %s287 = smul.addr %s286, 4
      %s288 = scalar_lea.vmem %s1, %s287
      %s289 = smul.u32 2, %s21
      %s290 = smul.u32 2, %s21
      %p291 = scmp.lt.s32.totalorder %s20, 1
      %s292 = scalar_select %p291, %s20, 1
      %p293 = scmp.lt.s32.totalorder %s290, 1
      %s294 = scalar_select %p293, %s290, 1
      %s295 = smul.addr %s292, 2
      %s296 = sadd.s32 %s294, %s295
      %s297 = smul.addr %s296, 8
      %s298 = scalar_lea.vmem %s5, %s297
      %s299 = smul.u32 2, %s21
      %v300 = vld [vmem:[%s2] sm:$0xff]
      %v301 = vld [vmem:[%s278] sm:$0x77]
      %303 = vset.pattern.permute.xlu0 0
      %304 = vperm.xlu0 %303, %v300
      %v305 = vpop.permute.xlu0 %304
      %v308 = vlaneseq
      %v309 = vshrl.u32 %v308, 7
      %v310 = vsub.s32 0, %v309
      %v311 = vrot.slane %v301, %v310
      %v312 = vlaneseq
      %v313 = vshrl.u32 %v312, 7
      %v314 = vsub.s32 4, %v313
      %v315 = vrot.slane %v301, %v314
      %v318 = vlaneseq
      %v319 = vshrl.u32 %v318, 7
      %v320 = vsub.s32 0, %v319
      %v321 = vrot.slane %v311, %v320
      %v322 = vlaneseq
      %v323 = vshrl.u32 %v322, 7
      %v324 = vsub.s32 0, %v323
      %v325 = vrot.slane %v315, %v324
      %v326 = vmul.f32 %v305, %v321
      %v327 = vmul.f32 %v305, %v325
      %328 = vset.pattern.permute.xlu0 1
      %329 = vperm.xlu0 %328, %v300
      %v330 = vpop.permute.xlu0 %329
      %v332 = vlaneseq
      %v333 = vshrl.u32 %v332, 7
      %v334 = vsub.s32 1, %v333
      %v335 = vrot.slane %v301, %v334
      %v336 = vlaneseq
      %v337 = vshrl.u32 %v336, 7
      %v338 = vsub.s32 5, %v337
      %v339 = vrot.slane %v301, %v338
      %v342 = vlaneseq
      %v343 = vshrl.u32 %v342, 7
      %v344 = vsub.s32 1, %v343
      %v345 = vrot.slane %v335, %v344
      %v346 = vlaneseq
      %v347 = vshrl.u32 %v346, 7
      %v348 = vsub.s32 1, %v347
      %v349 = vrot.slane %v339, %v348
      %v350 = vmul.f32 %v330, %v345
      %v351 = vmul.f32 %v330, %v349
      %v352 = vadd.f32 %v326, %v350
      %v353 = vadd.f32 %v327, %v351
      %354 = vset.pattern.permute.xlu0 2
      %355 = vperm.xlu0 %354, %v300
      %v356 = vpop.permute.xlu0 %355
      %v358 = vlaneseq
      %v359 = vshrl.u32 %v358, 7
      %v360 = vsub.s32 2, %v359
      %v361 = vrot.slane %v301, %v360
      %v362 = vlaneseq
      %v363 = vshrl.u32 %v362, 7
      %v364 = vsub.s32 6, %v363
      %v365 = vrot.slane %v301, %v364
      %v368 = vlaneseq
      %v369 = vshrl.u32 %v368, 7
      %v370 = vsub.s32 2, %v369
      %v371 = vrot.slane %v361, %v370
      %v372 = vlaneseq
      %v373 = vshrl.u32 %v372, 7
      %v374 = vsub.s32 2, %v373
      %v375 = vrot.slane %v365, %v374
      %v376 = vmul.f32 %v356, %v371
      %v377 = vmul.f32 %v356, %v375
      %v378 = vadd.f32 %v352, %v376
      %v379 = vadd.f32 %v353, %v377
      %v380 = vld [vmem:[%s3] sm:$0xff]
      %v381 = vld [vmem:[%s288] sm:$0x77]
      %383 = vset.pattern.permute.xlu0 0
      %384 = vperm.xlu0 %383, %v380
      %v385 = vpop.permute.xlu0 %384
      %v388 = vlaneseq
      %v389 = vshrl.u32 %v388, 7
      %v390 = vsub.s32 0, %v389
      %v391 = vrot.slane %v381, %v390
      %v392 = vlaneseq
      %v393 = vshrl.u32 %v392, 7
      %v394 = vsub.s32 4, %v393
      %v395 = vrot.slane %v381, %v394
      %v398 = vlaneseq
      %v399 = vshrl.u32 %v398, 7
      %v400 = vsub.s32 0, %v399
      %v401 = vrot.slane %v391, %v400
      %v402 = vlaneseq
      %v403 = vshrl.u32 %v402, 7
      %v404 = vsub.s32 0, %v403
      %v405 = vrot.slane %v395, %v404
      %v406 = vmul.f32 %v385, %v401
      %v407 = vmul.f32 %v385, %v405
      %408 = vset.pattern.permute.xlu0 1
      %409 = vperm.xlu0 %408, %v380
      %v410 = vpop.permute.xlu0 %409
      %v412 = vlaneseq
      %v413 = vshrl.u32 %v412, 7
      %v414 = vsub.s32 1, %v413
      %v415 = vrot.slane %v381, %v414
      %v416 = vlaneseq
      %v417 = vshrl.u32 %v416, 7
      %v418 = vsub.s32 5, %v417
      %v419 = vrot.slane %v381, %v418
      %v422 = vlaneseq
      %v423 = vshrl.u32 %v422, 7
      %v424 = vsub.s32 1, %v423
      %v425 = vrot.slane %v415, %v424
      %v426 = vlaneseq
      %v427 = vshrl.u32 %v426, 7
      %v428 = vsub.s32 1, %v427
      %v429 = vrot.slane %v419, %v428
      %v430 = vmul.f32 %v410, %v425
      %v431 = vmul.f32 %v410, %v429
      %v432 = vadd.f32 %v406, %v430
      %v433 = vadd.f32 %v407, %v431
      %434 = vset.pattern.permute.xlu0 2
      %435 = vperm.xlu0 %434, %v380
      %v436 = vpop.permute.xlu0 %435
      %v438 = vlaneseq
      %v439 = vshrl.u32 %v438, 7
      %v440 = vsub.s32 2, %v439
      %v441 = vrot.slane %v381, %v440
      %v442 = vlaneseq
      %v443 = vshrl.u32 %v442, 7
      %v444 = vsub.s32 6, %v443
      %v445 = vrot.slane %v381, %v444
      %v448 = vlaneseq
      %v449 = vshrl.u32 %v448, 7
      %v450 = vsub.s32 2, %v449
      %v451 = vrot.slane %v441, %v450
      %v452 = vlaneseq
      %v453 = vshrl.u32 %v452, 7
      %v454 = vsub.s32 2, %v453
      %v455 = vrot.slane %v445, %v454
      %v456 = vmul.f32 %v436, %v451
      %v457 = vmul.f32 %v436, %v455
      %v458 = vadd.f32 %v432, %v456
      %v459 = vadd.f32 %v433, %v457
      %v460 = vadd.f32 %v378, %v458
      %v461 = vadd.f32 %v379, %v459
      %v462 = vld [vmem:[%s4] sm:$0xff]
      %464 = vset.pattern.permute.xlu0 0
      %465 = vperm.xlu0 %464, %v462
      %v466 = vpop.permute.xlu0 %465
      %v468 = vadd.f32 %v460, %v466
      %v469 = vadd.f32 %v461, %v466
      %470 = vst [vmem:[%s298] sm:$0xff] %v468
      %471 = vst [vmem:[%s298 + $0x8] sm:$0xff] %v469
      %s472 = smul.u32 2, %s21
      %p473 = scmp.lt.s32.totalorder %s20, 1
      %s474 = scalar_select %p473, %s20, 1
      %p475 = scmp.lt.s32.totalorder %s472, 1
      %s476 = scalar_select %p475, %s472, 1
      %s477 = smul.addr %s474, 2
      %s478 = sadd.s32 %s476, %s477
      %s479 = smul.addr %s478, 8
      %s480 = scalar_lea.vmem %s5, %s479
      // Predicated region
      $region41: #{model_forward.3} parent=39 // pred_check
        %p481 = pneg %p167
      $region42: #{model_forward.3} parent=39 // pred_check_branch
        %483 = sbr.rel (%p481) target = $region44
      $region43: #{model_forward.3} parent=39 // pred_region
        %s484 = smul.u32 2, %s21
      $region44: #{model_forward.3} parent=39 // pred_fallthru
        _
    $region40: #{model_forward.3} parent=5 // pred_fallthru
      _
    %p485 = scmp.le.s32.totalorder 2, %s11
    // Predicated region
    $region45: #{model_forward.3} parent=5 // pred_check
      %p486 = pneg %p485
    $region46: #{model_forward.3} parent=5 // pred_check_branch
      %488 = sbr.rel (%p486) target = $region48
    $region47: #{model_forward.3} parent=5 // pred_region
      %s489 = ssub.s32 %s11, 2
      // Predicated region
      $region49: #{model_forward.3} parent=47 // pred_check
        %p490 = pneg %p173
      $region50: #{model_forward.3} parent=47 // pred_check_branch
        %492 = sbr.rel (%p490) target = $region52
      $region51: #{model_forward.3} parent=47 // pred_region
        %s493 = smul.u32 2, %s23
        %p494 = scmp.lt.s32.totalorder %s22, 1
        %s495 = scalar_select %p494, %s22, 1
        %p496 = scmp.lt.s32.totalorder %s493, 1
        %s497 = scalar_select %p496, %s493, 1
        %s498 = smul.addr %s495, 2
        %s499 = sadd.s32 %s497, %s498
        %s500 = smul.addr %s499, 8
        %s501 = scalar_lea.vmem %s5, %s500
      $region52: #{model_forward.3} parent=47 // pred_fallthru
        _
    $region48: #{model_forward.3} parent=5 // pred_fallthru
      _
  $region6: #{model_forward.3} parent=0 // loop_footer
    %s15 = sadd.s32 1, %s11
  $region7: #{model_forward.3} parent=0 // loop_footer_branch
    %10 = sbr.rel target = $region3
  $region8: #{model_forward.3} parent=0 // loop_exit
    _

// kernel: model_forward.2
$region0: #{model_forward.2}
  #allocation0 [shape = 'u32[]', space=smem, size = 0x4, offset = 0x4, fixed_abs, tag = 'smem constant byte address 0x4 - core index']
  #allocation1 [shape = 'u32[144,128]{1,0:T(1,128)}', space=vmem, size = 0x12000, scoped, tag = 'internal scratch']
  %s0 = inlined_call_operand.vmem [shape: f32[2,3,256], index: 0, kind: input, shape index: {}]
  %s1 = inlined_call_operand.vmem [shape: f32[2,3,256], index: 1, kind: input, shape index: {}]
  %s2 = inlined_call_operand.vmem [shape: f32[8,3], index: 2, kind: input, shape index: {}]
  %s3 = inlined_call_operand.vmem [shape: f32[8,3], index: 3, kind: input, shape index: {}]
  %s4 = inlined_call_operand.vmem [shape: f32[8,1], index: 4, kind: output, shape index: {0}]
  %s5 = inlined_call_operand.vmem [shape: f32[8,1], index: 5, kind: output, shape index: {1}]
  %s6 = inlined_call_operand.vmem [shape: f32[8,1], index: 6, kind: output, shape index: {2}]
  %s7 = inlined_call_operand.vmem [shape: f32[8,1], index: 7, kind: output, shape index: {3}]
  %s8 = inlined_call_operand.vmem [shape: f32[8,1], index: 8, kind: output, shape index: {4}]
  %9 = xla_tuple %s4, %s5, %s6, %s7, %s8
  %s10 = sld [smem:[#allocation0]]
  $region85: #{model_forward.2} parent=0
    _
  %s12 = ssub.s32 1, %s10
  %s13 = scalar_select 0, %s12, %s10
  loop: start=0, step=1, limit=4
  $region2: #{model_forward.2} parent=0 // loop_pre_header
    _
  $region3: #{model_forward.2} parent=0 // loop_header
    %s15 = sphi 0, %s19
    %p16 = scmp.ge.s32.totalorder %s15, 4
    %s22 = sphi 0, %s34
    %s23 = sphi 0, %s30
    %s24 = sphi 0, %s22
    %s25 = sphi 0, %s23
    %s26 = sphi 0, %s24
    %s27 = sphi 0, %s25
    %s39 = sphi 0, %s41
    %s42 = sphi 0, %s39
    %s43 = sphi 0, %s42
    %s59 = sphi 0, %s43
    %s67 = sphi 0, %s69
    %s70 = sphi 0, %s67
    %s71 = sphi 0, %s70
    %s87 = sphi 0, %s71
    %s91 = sphi 0, %s91
    %s93 = sphi 0, %s91
    %s94 = sphi 0, %s93
    %s108 = sphi 0, %s94
    %s112 = sphi 0, %s112
    %s114 = sphi 0, %s112
    %s115 = sphi 0, %s114
    %s129 = sphi 0, %s115
    %s133 = sphi 0, %s133
    %s135 = sphi 0, %s133
    %s136 = sphi 0, %s135
    %s150 = sphi 0, %s136
    %s154 = sphi 0, %s154
    %s156 = sphi 0, %s154
    %s157 = sphi 0, %s156
    %s171 = sphi 0, %s157
    %s175 = sphi 0, %s175
    %s177 = sphi 0, %s175
    %s178 = sphi 0, %s177
    %s192 = sphi 0, %s178
    %s196 = sphi 0, %s196
    %s198 = sphi 0, %s196
    %s199 = sphi 0, %s198
    %s213 = sphi 0, %s199
    %s217 = sphi 0, %s217
    %s219 = sphi 0, %s217
    %s220 = sphi 0, %s219
    %s234 = sphi 0, %s220
  $region4: #{model_forward.2} parent=0 // loop_header_branch
    %18 = sbr.rel (%p16) target = $region8
  $region5: #{model_forward.2} parent=0 // loop_body
    %s20 = ssub.s32 %s15, 1
    %s21 = ssub.s32 %s15, 2
    %s28 = sadd.s32 1, %s23
    %p29 = scmp.ge.s32.totalorder %s28, 1
    %s30 = scalar_select %p29, 0, %s28
    %s31 = sadd.s32 1, %s22
    %s32 = scalar_select %p29, %s31, %s22
    %p33 = scmp.ge.s32.totalorder %s32, 2
    %s34 = scalar_select %p33, 0, %s32
    %s35 = ssub.s32 %s22, %s34
    %s36 = ssub.s32 %s23, %s30
    %s37 = sor.u32 %s35, %s36
    %p38 = scmp.eq.s32.totalorder %s37, 0
    %s40 = sadd.s32 %s39, 1
    %s41 = scalar_select %p38, %s39, %s40
    %p44 = pneg %p38
    %p45 = scmp.eq.s32.totalorder %s15, 1
    %p46 = por %p44, %p45
    %p47 = scmp.ne.s32.totalorder %s39, %s42
    %p48 = scmp.eq.s32.totalorder %s15, 0
    %p49 = por %p47, %p48
    %p50 = scmp.ne.s32.totalorder %s39, %s42
    %p51 = scmp.eq.s32.totalorder %s20, 1
    %p52 = por %p50, %p51
    %p53 = scmp.ne.s32.totalorder %s42, %s43
    %p54 = scmp.eq.s32.totalorder %s20, 0
    %p55 = por %p53, %p54
    %p56 = scmp.ne.s32.totalorder %s42, %s43
    %p57 = scmp.eq.s32.totalorder %s21, 1
    %p58 = por %p56, %p57
    %p60 = scmp.ne.s32.totalorder %s43, %s59
    %p61 = scmp.eq.s32.totalorder %s21, 0
    %p62 = por %p60, %p61
    %s63 = ssub.s32 %s22, %s34
    %s64 = ssub.s32 %s23, %s30
    %s65 = sor.u32 %s63, %s64
    %p66 = scmp.eq.s32.totalorder %s65, 0
    %s68 = sadd.s32 %s67, 1
    %s69 = scalar_select %p66, %s67, %s68
    %p72 = pneg %p66
    %p73 = scmp.eq.s32.totalorder %s15, 1
    %p74 = por %p72, %p73
    %p75 = scmp.ne.s32.totalorder %s67, %s70
    %p76 = scmp.eq.s32.totalorder %s15, 0
    %p77 = por %p75, %p76
    %p78 = scmp.ne.s32.totalorder %s67, %s70
    %p79 = scmp.eq.s32.totalorder %s20, 1
    %p80 = por %p78, %p79
    %p81 = scmp.ne.s32.totalorder %s70, %s71
    %p82 = scmp.eq.s32.totalorder %s20, 0
    %p83 = por %p81, %p82
    %p84 = scmp.ne.s32.totalorder %s70, %s71
    %p85 = scmp.eq.s32.totalorder %s21, 1
    %p86 = por %p84, %p85
    %p88 = scmp.ne.s32.totalorder %s71, %s87
    %p89 = scmp.eq.s32.totalorder %s21, 0
    %p90 = por %p88, %p89
    %s92 = sadd.s32 %s91, 1
    %p95 = scmp.eq.s32.totalorder %s15, 1
    %p96 = scmp.ne.s32.totalorder %s91, %s93
    %p97 = scmp.eq.s32.totalorder %s15, 0
    %p98 = por %p96, %p97
    %p99 = scmp.ne.s32.totalorder %s91, %s93
    %p100 = scmp.eq.s32.totalorder %s20, 1
    %p101 = por %p99, %p100
    %p102 = scmp.ne.s32.totalorder %s93, %s94
    %p103 = scmp.eq.s32.totalorder %s20, 0
    %p104 = por %p102, %p103
    %p105 = scmp.ne.s32.totalorder %s93, %s94
    %p106 = scmp.eq.s32.totalorder %s21, 1
    %p107 = por %p105, %p106
    %p109 = scmp.ne.s32.totalorder %s94, %s108
    %p110 = scmp.eq.s32.totalorder %s21, 0
    %p111 = por %p109, %p110
    %s113 = sadd.s32 %s112, 1
    %p116 = scmp.eq.s32.totalorder %s15, 1
    %p117 = scmp.ne.s32.totalorder %s112, %s114
    %p118 = scmp.eq.s32.totalorder %s15, 0
    %p119 = por %p117, %p118
    %p120 = scmp.ne.s32.totalorder %s112, %s114
    %p121 = scmp.eq.s32.totalorder %s20, 1
    %p122 = por %p120, %p121
    %p123 = scmp.ne.s32.totalorder %s114, %s115
    %p124 = scmp.eq.s32.totalorder %s20, 0
    %p125 = por %p123, %p124
    %p126 = scmp.ne.s32.totalorder %s114, %s115
    %p127 = scmp.eq.s32.totalorder %s21, 1
    %p128 = por %p126, %p127
    %p130 = scmp.ne.s32.totalorder %s115, %s129
    %p131 = scmp.eq.s32.totalorder %s21, 0
    %p132 = por %p130, %p131
    %s134 = sadd.s32 %s133, 1
    %p137 = scmp.eq.s32.totalorder %s15, 1
    %p138 = scmp.ne.s32.totalorder %s133, %s135
    %p139 = scmp.eq.s32.totalorder %s15, 0
    %p140 = por %p138, %p139
    %p141 = scmp.ne.s32.totalorder %s133, %s135
    %p142 = scmp.eq.s32.totalorder %s20, 1
    %p143 = por %p141, %p142
    %p144 = scmp.ne.s32.totalorder %s135, %s136
    %p145 = scmp.eq.s32.totalorder %s20, 0
    %p146 = por %p144, %p145
    %p147 = scmp.ne.s32.totalorder %s135, %s136
    %p148 = scmp.eq.s32.totalorder %s21, 1
    %p149 = por %p147, %p148
    %p151 = scmp.ne.s32.totalorder %s136, %s150
    %p152 = scmp.eq.s32.totalorder %s21, 0
    %p153 = por %p151, %p152
    %s155 = sadd.s32 %s154, 1
    %p158 = scmp.eq.s32.totalorder %s15, 1
    %p159 = scmp.ne.s32.totalorder %s154, %s156
    %p160 = scmp.eq.s32.totalorder %s15, 0
    %p161 = por %p159, %p160
    %p162 = scmp.ne.s32.totalorder %s154, %s156
    %p163 = scmp.eq.s32.totalorder %s20, 1
    %p164 = por %p162, %p163
    %p165 = scmp.ne.s32.totalorder %s156, %s157
    %p166 = scmp.eq.s32.totalorder %s20, 0
    %p167 = por %p165, %p166
    %p168 = scmp.ne.s32.totalorder %s156, %s157
    %p169 = scmp.eq.s32.totalorder %s21, 1
    %p170 = por %p168, %p169
    %p172 = scmp.ne.s32.totalorder %s157, %s171
    %p173 = scmp.eq.s32.totalorder %s21, 0
    %p174 = por %p172, %p173
    %s176 = sadd.s32 %s175, 1
    %p179 = scmp.eq.s32.totalorder %s15, 1
    %p180 = scmp.ne.s32.totalorder %s175, %s177
    %p181 = scmp.eq.s32.totalorder %s15, 0
    %p182 = por %p180, %p181
    %p183 = scmp.ne.s32.totalorder %s175, %s177
    %p184 = scmp.eq.s32.totalorder %s20, 1
    %p185 = por %p183, %p184
    %p186 = scmp.ne.s32.totalorder %s177, %s178
    %p187 = scmp.eq.s32.totalorder %s20, 0
    %p188 = por %p186, %p187
    %p189 = scmp.ne.s32.totalorder %s177, %s178
    %p190 = scmp.eq.s32.totalorder %s21, 1
    %p191 = por %p189, %p190
    %p193 = scmp.ne.s32.totalorder %s178, %s192
    %p194 = scmp.eq.s32.totalorder %s21, 0
    %p195 = por %p193, %p194
    %s197 = sadd.s32 %s196, 1
    %p200 = scmp.eq.s32.totalorder %s15, 1
    %p201 = scmp.ne.s32.totalorder %s196, %s198
    %p202 = scmp.eq.s32.totalorder %s15, 0
    %p203 = por %p201, %p202
    %p204 = scmp.ne.s32.totalorder %s196, %s198
    %p205 = scmp.eq.s32.totalorder %s20, 1
    %p206 = por %p204, %p205
    %p207 = scmp.ne.s32.totalorder %s198, %s199
    %p208 = scmp.eq.s32.totalorder %s20, 0
    %p209 = por %p207, %p208
    %p210 = scmp.ne.s32.totalorder %s198, %s199
    %p211 = scmp.eq.s32.totalorder %s21, 1
    %p212 = por %p210, %p211
    %p214 = scmp.ne.s32.totalorder %s199, %s213
    %p215 = scmp.eq.s32.totalorder %s21, 0
    %p216 = por %p214, %p215
    %s218 = sadd.s32 %s217, 1
    %p221 = scmp.eq.s32.totalorder %s15, 1
    %p222 = scmp.ne.s32.totalorder %s217, %s219
    %p223 = scmp.eq.s32.totalorder %s15, 0
    %p224 = por %p222, %p223
    %p225 = scmp.ne.s32.totalorder %s217, %s219
    %p226 = scmp.eq.s32.totalorder %s20, 1
    %p227 = por %p225, %p226
    %p228 = scmp.ne.s32.totalorder %s219, %s220
    %p229 = scmp.eq.s32.totalorder %s20, 0
    %p230 = por %p228, %p229
    %p231 = scmp.ne.s32.totalorder %s219, %s220
    %p232 = scmp.eq.s32.totalorder %s21, 1
    %p233 = por %p231, %p232
    %p235 = scmp.ne.s32.totalorder %s220, %s234
    %p236 = scmp.eq.s32.totalorder %s21, 0
    %p237 = por %p235, %p236
    %p238 = scmp.le.s32.totalorder 1, %s15
    %p239 = scmp.lt.s32.totalorder %s15, 3
    %p240 = pnand %p238, %p239
    %p241 = pneg %p240
    // Predicated region
    $region9: #{model_forward.2} parent=5 // pred_check
      _
    $region10: #{model_forward.2} parent=5 // pred_check_branch
      %243 = sbr.rel (%p240) target = $region12
    $region11: #{model_forward.2} parent=5 // pred_region
      %s244 = ssub.s32 %s15, 1
      // Predicated region
      $region13: #{model_forward.2} parent=11 // pred_check
        %p245 = pneg %p104
      $region14: #{model_forward.2} parent=11 // pred_check_branch
        %247 = sbr.rel (%p245) target = $region16
      $region15: #{model_forward.2} parent=11 // pred_region
        _
      $region16: #{model_forward.2} parent=11 // pred_fallthru
        _
      // Predicated region
      $region17: #{model_forward.2} parent=11 // pred_check
        %p248 = pneg %p125
      $region18: #{model_forward.2} parent=11 // pred_check_branch
        %250 = sbr.rel (%p248) target = $region20
      $region19: #{model_forward.2} parent=11 // pred_region
        _
      $region20: #{model_forward.2} parent=11 // pred_fallthru
        _
    $region12: #{model_forward.2} parent=5 // pred_fallthru
      _
    %p251 = scmp.lt.s32.totalorder %s15, 2
    // Predicated region
    $region21: #{model_forward.2} parent=5 // pred_check
      %p252 = pneg %p251
    $region22: #{model_forward.2} parent=5 // pred_check_branch
      %254 = sbr.rel (%p252) target = $region24
    $region23: #{model_forward.2} parent=5 // pred_region
      // Predicated region
      $region25: #{model_forward.2} parent=23 // pred_check
        %p255 = pneg %p49
      $region26: #{model_forward.2} parent=23 // pred_check_branch
        %257 = sbr.rel (%p255) target = $region28
      $region27: #{model_forward.2} parent=23 // pred_region
        %s258 = smul.u32 2, %s23
        %p259 = scmp.lt.s32.totalorder %s22, 1
        %s260 = scalar_select %p259, %s22, 1
        %p261 = scmp.lt.s32.totalorder %s258, 1
        %s262 = scalar_select %p261, %s258, 1
        %s263 = smul.addr %s260, 2
        %s264 = sadd.s32 %s262, %s263
        %s265 = smul.addr %s264, 4
        %s266 = scalar_lea.vmem %s0, %s265
        %s267 = smul.u32 2, %s23
      $region28: #{model_forward.2} parent=23 // pred_fallthru
        _
      // Predicated region
      $region29: #{model_forward.2} parent=23 // pred_check
        %p268 = pneg %p77
      $region30: #{model_forward.2} parent=23 // pred_check_branch
        %270 = sbr.rel (%p268) target = $region32
      $region31: #{model_forward.2} parent=23 // pred_region
        %s271 = smul.u32 2, %s23
        %p272 = scmp.lt.s32.totalorder %s22, 1
        %s273 = scalar_select %p272, %s22, 1
        %p274 = scmp.lt.s32.totalorder %s271, 1
        %s275 = scalar_select %p274, %s271, 1
        %s276 = smul.addr %s273, 2
        %s277 = sadd.s32 %s275, %s276
        %s278 = smul.addr %s277, 4
        %s279 = scalar_lea.vmem %s1, %s278
        %s280 = smul.u32 2, %s23
      $region32: #{model_forward.2} parent=23 // pred_fallthru
        _
    $region24: #{model_forward.2} parent=5 // pred_fallthru
      _
    %p281 = scmp.le.s32.totalorder 1, %s15
    %p282 = scmp.lt.s32.totalorder %s15, 3
    %p283 = pnand %p281, %p282
    %p284 = pneg %p283
    // Predicated region
    $region33: #{model_forward.2} parent=5 // pred_check
      _
    $region34: #{model_forward.2} parent=5 // pred_check_branch
      %286 = sbr.rel (%p283) target = $region36
    $region35: #{model_forward.2} parent=5 // pred_region
      %s287 = ssub.s32 %s15, 1
      %s288 = smul.u32 2, %s25
      %p289 = scmp.lt.s32.totalorder %s24, 1
      %s290 = scalar_select %p289, %s24, 1
      %p291 = scmp.lt.s32.totalorder %s288, 1
      %s292 = scalar_select %p291, %s288, 1
      %s293 = smul.addr %s290, 2
      %s294 = sadd.s32 %s292, %s293
      %s295 = smul.addr %s294, 4
      %s296 = scalar_lea.vmem %s0, %s295
      %p297 = pneg %p55
      %p298 = pneg %p52
      %s299 = smul.u32 2, %s25
      %p300 = scmp.lt.s32.totalorder %s24, 1
      %s301 = scalar_select %p300, %s24, 1
      %p302 = scmp.lt.s32.totalorder %s299, 1
      %s303 = scalar_select %p302, %s299, 1
      %s304 = smul.addr %s301, 2
      %s305 = sadd.s32 %s303, %s304
      %s306 = smul.addr %s305, 4
      %s307 = scalar_lea.vmem %s1, %s306
      %p308 = pneg %p83
      %p309 = pneg %p80
      %p310 = pneg %p104
      %p311 = pneg %p101
      %p312 = pneg %p125
      %p313 = pneg %p122
      %p314 = pneg %p146
      %p315 = pneg %p143
      %p316 = pneg %p167
      %p317 = pneg %p164
      %p318 = pneg %p188
      %p319 = pneg %p185
      %p320 = pneg %p209
      %p321 = pneg %p206
      %p322 = pneg %p230
      %p323 = pneg %p227
      %s324 = smul.u32 2, %s25
      %p325 = scmp.lt.s32.totalorder %s24, 1
      %s326 = scalar_select %p325, %s24, 1
      %p327 = scmp.lt.s32.totalorder %s324, 1
      %s328 = scalar_select %p327, %s324, 1
      %s329 = smul.addr %s326, 2
      %s330 = sadd.s32 %s328, %s329
      %s331 = smul.addr %s330, 4
      %s332 = scalar_lea.vmem %s0, %s331
      %s333 = smul.u32 2, %s25
      %s334 = smul.u32 2, %s25
      %p335 = scmp.lt.s32.totalorder %s24, 1
      %s336 = scalar_select %p335, %s24, 1
      %p337 = scmp.lt.s32.totalorder %s334, 1
      %s338 = scalar_select %p337, %s334, 1
      %s339 = smul.addr %s336, 2
      %s340 = sadd.s32 %s338, %s339
      %s341 = smul.addr %s340, 4
      %s342 = scalar_lea.vmem %s1, %s341
      %s343 = smul.u32 2, %s25
      %p344 = scmp.eq.s32.totalorder %s24, 0
      %p345 = scmp.eq.s32.totalorder %s25, 0
      %p346 = pnand %p344, %p345
      %p347 = pneg %p346
      // Predicated region
      $region37: #{model_forward.2} parent=35 // pred_check
        _
      $region38: #{model_forward.2} parent=35 // pred_check_branch
        %349 = sbr.rel (%p346) target = $region40
      $region39: #{model_forward.2} parent=35 // pred_region
        %vm350 = vcmask 7168
        %351 = vst.msk [vmem:[%s4] sm:$0xff] %vm350, 0.0
        %352 = vst.msk [vmem:[%s5] sm:$0xff] %vm350, 0.0
        %353 = vst.msk [vmem:[%s6] sm:$0xff] %vm350, 0.0
        %354 = vst.msk [vmem:[%s7] sm:$0xff] %vm350, 0.0
        %355 = vst.msk [vmem:[%s8] sm:$0xff] %vm350, 0.0
      $region40: #{model_forward.2} parent=35 // pred_fallthru
        _
      %v356 = vld [vmem:[%s2] sm:$0xff]
      %v357 = vld [vmem:[%s332] sm:$0x77]
      %359 = vset.pattern.permute.xlu0 0
      %360 = vperm.xlu0 %359, %v356
      %v361 = vpop.permute.xlu0 %360
      %v364 = vlaneseq
      %v365 = vshrl.u32 %v364, 7
      %v366 = vsub.s32 0, %v365
      %v367 = vrot.slane %v357, %v366
      %v368 = vlaneseq
      %v369 = vshrl.u32 %v368, 7
      %v370 = vsub.s32 4, %v369
      %v371 = vrot.slane %v357, %v370
      %v374 = vlaneseq
      %v375 = vshrl.u32 %v374, 7
      %v376 = vsub.s32 0, %v375
      %v377 = vrot.slane %v367, %v376
      %v378 = vlaneseq
      %v379 = vshrl.u32 %v378, 7
      %v380 = vsub.s32 0, %v379
      %v381 = vrot.slane %v371, %v380
      %v382 = vmul.f32 %v361, %v377
      %v383 = vmul.f32 %v361, %v381
      %384 = vset.pattern.permute.xlu0 1
      %385 = vperm.xlu0 %384, %v356
      %v386 = vpop.permute.xlu0 %385
      %v388 = vlaneseq
      %v389 = vshrl.u32 %v388, 7
      %v390 = vsub.s32 1, %v389
      %v391 = vrot.slane %v357, %v390
      %v392 = vlaneseq
      %v393 = vshrl.u32 %v392, 7
      %v394 = vsub.s32 5, %v393
      %v395 = vrot.slane %v357, %v394
      %v398 = vlaneseq
      %v399 = vshrl.u32 %v398, 7
      %v400 = vsub.s32 1, %v399
      %v401 = vrot.slane %v391, %v400
      %v402 = vlaneseq
      %v403 = vshrl.u32 %v402, 7
      %v404 = vsub.s32 1, %v403
      %v405 = vrot.slane %v395, %v404
      %v406 = vmul.f32 %v386, %v401
      %v407 = vmul.f32 %v386, %v405
      %v408 = vadd.f32 %v382, %v406
      %v409 = vadd.f32 %v383, %v407
      %410 = vset.pattern.permute.xlu0 2
      %411 = vperm.xlu0 %410, %v356
      %v412 = vpop.permute.xlu0 %411
      %v414 = vlaneseq
      %v415 = vshrl.u32 %v414, 7
      %v416 = vsub.s32 2, %v415
      %v417 = vrot.slane %v357, %v416
      %v418 = vlaneseq
      %v419 = vshrl.u32 %v418, 7
      %v420 = vsub.s32 6, %v419
      %v421 = vrot.slane %v357, %v420
      %v424 = vlaneseq
      %v425 = vshrl.u32 %v424, 7
      %v426 = vsub.s32 2, %v425
      %v427 = vrot.slane %v417, %v426
      %v428 = vlaneseq
      %v429 = vshrl.u32 %v428, 7
      %v430 = vsub.s32 2, %v429
      %v431 = vrot.slane %v421, %v430
      %v432 = vmul.f32 %v412, %v427
      %v433 = vmul.f32 %v412, %v431
      %v434 = vadd.f32 %v408, %v432
      %v435 = vadd.f32 %v409, %v433
      %v436 = vld [vmem:[%s3] sm:$0xff]
      %v437 = vld [vmem:[%s342] sm:$0x77]
      %439 = vset.pattern.permute.xlu0 0
      %440 = vperm.xlu0 %439, %v436
      %v441 = vpop.permute.xlu0 %440
      %v444 = vlaneseq
      %v445 = vshrl.u32 %v444, 7
      %v446 = vsub.s32 0, %v445
      %v447 = vrot.slane %v437, %v446
      %v448 = vlaneseq
      %v449 = vshrl.u32 %v448, 7
      %v450 = vsub.s32 4, %v449
      %v451 = vrot.slane %v437, %v450
      %v454 = vlaneseq
      %v455 = vshrl.u32 %v454, 7
      %v456 = vsub.s32 0, %v455
      %v457 = vrot.slane %v447, %v456
      %v458 = vlaneseq
      %v459 = vshrl.u32 %v458, 7
      %v460 = vsub.s32 0, %v459
      %v461 = vrot.slane %v451, %v460
      %v462 = vmul.f32 %v441, %v457
      %v463 = vmul.f32 %v441, %v461
      %464 = vset.pattern.permute.xlu0 1
      %465 = vperm.xlu0 %464, %v436
      %v466 = vpop.permute.xlu0 %465
      %v468 = vlaneseq
      %v469 = vshrl.u32 %v468, 7
      %v470 = vsub.s32 1, %v469
      %v471 = vrot.slane %v437, %v470
      %v472 = vlaneseq
      %v473 = vshrl.u32 %v472, 7
      %v474 = vsub.s32 5, %v473
      %v475 = vrot.slane %v437, %v474
      %v478 = vlaneseq
      %v479 = vshrl.u32 %v478, 7
      %v480 = vsub.s32 1, %v479
      %v481 = vrot.slane %v471, %v480
      %v482 = vlaneseq
      %v483 = vshrl.u32 %v482, 7
      %v484 = vsub.s32 1, %v483
      %v485 = vrot.slane %v475, %v484
      %v486 = vmul.f32 %v466, %v481
      %v487 = vmul.f32 %v466, %v485
      %v488 = vadd.f32 %v462, %v486
      %v489 = vadd.f32 %v463, %v487
      %490 = vset.pattern.permute.xlu0 2
      %491 = vperm.xlu0 %490, %v436
      %v492 = vpop.permute.xlu0 %491
      %v494 = vlaneseq
      %v495 = vshrl.u32 %v494, 7
      %v496 = vsub.s32 2, %v495
      %v497 = vrot.slane %v437, %v496
      %v498 = vlaneseq
      %v499 = vshrl.u32 %v498, 7
      %v500 = vsub.s32 6, %v499
      %v501 = vrot.slane %v437, %v500
      %v504 = vlaneseq
      %v505 = vshrl.u32 %v504, 7
      %v506 = vsub.s32 2, %v505
      %v507 = vrot.slane %v497, %v506
      %v508 = vlaneseq
      %v509 = vshrl.u32 %v508, 7
      %v510 = vsub.s32 2, %v509
      %v511 = vrot.slane %v501, %v510
      %v512 = vmul.f32 %v492, %v507
      %v513 = vmul.f32 %v492, %v511
      %v514 = vadd.f32 %v488, %v512
      %v515 = vadd.f32 %v489, %v513
      %v516 = vld [vmem:[%s4] sm:$0xff]
      %v517 = vadd.f32 %v434, %v435
      %518 = vadd.xlane.f32.xlu0 %v517
      %v519 = vpop.xlane.xlu0 %518
      %v520 = vadd.f32 %v516, %v519
      %vm521 = vcmask 7168
      %522 = vst.msk [vmem:[%s4] sm:$0xff] %vm521, %v520
      %v523 = vld [vmem:[%s5] sm:$0xff]
      %v524 = vmul.f32 %v434, %v434
      %v525 = vmul.f32 %v435, %v435
      %v526 = vadd.f32 %v524, %v525
      %527 = vadd.xlane.f32.xlu0 %v526
      %v528 = vpop.xlane.xlu0 %527
      %v529 = vadd.f32 %v523, %v528
      %530 = vst.msk [vmem:[%s5] sm:$0xff] %vm521, %v529
      %v531 = vld [vmem:[%s6] sm:$0xff]
      %v532 = vadd.f32 %v514, %v515
      %533 = vadd.xlane.f32.xlu0 %v532
      %v534 = vpop.xlane.xlu0 %533
      %v535 = vadd.f32 %v531, %v534
      %536 = vst.msk [vmem:[%s6] sm:$0xff] %vm521, %v535
      %v537 = vld [vmem:[%s7] sm:$0xff]
      %v538 = vmul.f32 %v514, %v514
      %v539 = vmul.f32 %v515, %v515
      %v540 = vadd.f32 %v538, %v539
      %541 = vadd.xlane.f32.xlu0 %v540
      %v542 = vpop.xlane.xlu0 %541
      %v543 = vadd.f32 %v537, %v542
      %544 = vst.msk [vmem:[%s7] sm:$0xff] %vm521, %v543
      %v545 = vld [vmem:[%s8] sm:$0xff]
      %v546 = vmul.f32 %v434, %v514
      %v547 = vmul.f32 %v435, %v515
      %v548 = vadd.f32 %v546, %v547
      %549 = vadd.xlane.f32.xlu0 %v548
      %v550 = vpop.xlane.xlu0 %549
      %v551 = vadd.f32 %v545, %v550
      %552 = vst.msk [vmem:[%s8] sm:$0xff] %vm521, %v551
      // Predicated region
      $region41: #{model_forward.2} parent=35 // pred_check
        %p553 = pneg %p143
      $region42: #{model_forward.2} parent=35 // pred_check_branch
        %555 = sbr.rel (%p553) target = $region44
      $region43: #{model_forward.2} parent=35 // pred_region
        _
      $region44: #{model_forward.2} parent=35 // pred_fallthru
        _
      // Predicated region
      $region45: #{model_forward.2} parent=35 // pred_check
        %p556 = pneg %p164
      $region46: #{model_forward.2} parent=35 // pred_check_branch
        %558 = sbr.rel (%p556) target = $region48
      $region47: #{model_forward.2} parent=35 // pred_region
        _
      $region48: #{model_forward.2} parent=35 // pred_fallthru
        _
      // Predicated region
      $region49: #{model_forward.2} parent=35 // pred_check
        %p559 = pneg %p185
      $region50: #{model_forward.2} parent=35 // pred_check_branch
        %561 = sbr.rel (%p559) target = $region52
      $region51: #{model_forward.2} parent=35 // pred_region
        _
      $region52: #{model_forward.2} parent=35 // pred_fallthru
        _
      // Predicated region
      $region53: #{model_forward.2} parent=35 // pred_check
        %p562 = pneg %p206
      $region54: #{model_forward.2} parent=35 // pred_check_branch
        %564 = sbr.rel (%p562) target = $region56
      $region55: #{model_forward.2} parent=35 // pred_region
        _
      $region56: #{model_forward.2} parent=35 // pred_fallthru
        _
      // Predicated region
      $region57: #{model_forward.2} parent=35 // pred_check
        %p565 = pneg %p227
      $region58: #{model_forward.2} parent=35 // pred_check_branch
        %567 = sbr.rel (%p565) target = $region60
      $region59: #{model_forward.2} parent=35 // pred_region
        _
      $region60: #{model_forward.2} parent=35 // pred_fallthru
        _
      // Predicated region
      $region61: #{model_forward.2} parent=35 // pred_check
        %p568 = pneg %p143
      $region62: #{model_forward.2} parent=35 // pred_check_branch
        %570 = sbr.rel (%p568) target = $region64
      $region63: #{model_forward.2} parent=35 // pred_region
        _
      $region64: #{model_forward.2} parent=35 // pred_fallthru
        _
      // Predicated region
      $region65: #{model_forward.2} parent=35 // pred_check
        %p571 = pneg %p164
      $region66: #{model_forward.2} parent=35 // pred_check_branch
        %573 = sbr.rel (%p571) target = $region68
      $region67: #{model_forward.2} parent=35 // pred_region
        _
      $region68: #{model_forward.2} parent=35 // pred_fallthru
        _
      // Predicated region
      $region69: #{model_forward.2} parent=35 // pred_check
        %p574 = pneg %p185
      $region70: #{model_forward.2} parent=35 // pred_check_branch
        %576 = sbr.rel (%p574) target = $region72
      $region71: #{model_forward.2} parent=35 // pred_region
        _
      $region72: #{model_forward.2} parent=35 // pred_fallthru
        _
      // Predicated region
      $region73: #{model_forward.2} parent=35 // pred_check
        %p577 = pneg %p206
      $region74: #{model_forward.2} parent=35 // pred_check_branch
        %579 = sbr.rel (%p577) target = $region76
      $region75: #{model_forward.2} parent=35 // pred_region
        _
      $region76: #{model_forward.2} parent=35 // pred_fallthru
        _
      // Predicated region
      $region77: #{model_forward.2} parent=35 // pred_check
        %p580 = pneg %p227
      $region78: #{model_forward.2} parent=35 // pred_check_branch
        %582 = sbr.rel (%p580) target = $region80
      $region79: #{model_forward.2} parent=35 // pred_region
        _
      $region80: #{model_forward.2} parent=35 // pred_fallthru
        _
    $region36: #{model_forward.2} parent=5 // pred_fallthru
      _
    %p583 = scmp.le.s32.totalorder 2, %s15
    // Predicated region
    $region81: #{model_forward.2} parent=5 // pred_check
      %p584 = pneg %p583
    $region82: #{model_forward.2} parent=5 // pred_check_branch
      %586 = sbr.rel (%p584) target = $region84
    $region83: #{model_forward.2} parent=5 // pred_region
      %s587 = ssub.s32 %s15, 2
    $region84: #{model_forward.2} parent=5 // pred_fallthru
      _
  $region6: #{model_forward.2} parent=0 // loop_footer
    %s19 = sadd.s32 1, %s15
  $region7: #{model_forward.2} parent=0 // loop_footer_branch
    %14 = sbr.rel target = $region3
  $region8: #{model_forward.2} parent=0 // loop_exit
    _

</llo_original>
